<compile_context>
chip_gen: v5e
topology: v5e:2x2
jax: 0.10.0
libtpu: 0.0.40
codegen_flags: <defaults>
</compile_context>

<pallas_src>
import functools

import numpy as np
import jax
import jax.numpy as jnp
from jax.experimental import pallas as pl
from jax.experimental.pallas import tpu as pltpu


def _round_up(x, m):
    return ((x + m - 1) // m) * m


def _vmem_cap_bytes():
    """Physical per-core VMEM (bytes); conservative fallback = 64 MiB (v7x)."""
    try:
        info = pltpu.get_tpu_info()
        cap = int(getattr(info, "vmem_capacity_bytes", 64 << 20))
    except Exception:
        cap = 64 << 20
    return max(cap, 32 << 20)


# ----------------------------------------------------------------------------
# Pallas kernel: fused irFFT-matmul + overlap-add + envelope normalization.
# ----------------------------------------------------------------------------
def _make_istft_kernel(seg_tile, n_overlap, hop, col_chunk):
    """seg_tile: output segments per tile; n_overlap = R = n_fft // hop."""
    n_chunks = -(-hop // col_chunk)

    def kernel(re_main_ref, re_tail_ref, im_main_ref, im_tail_ref,
               cos_ref, sin_ref, inv_env_ref, out_ref, q_buf):
        # Frame window for this tile: an aligned seg_tile-row block plus the
        # first `ext` rows of the next block (delivered by a second BlockSpec
        # on the same array).  All MXU operands are sublane-aligned.
        a_re = jnp.concatenate([re_main_ref[...], re_tail_ref[...]], axis=0)
        a_im = jnp.concatenate([im_main_ref[...], im_tail_ref[...]], axis=0)

        for c in range(n_chunks):              # chunk the hop (N) dimension
            c0 = c * col_chunk
            cw = min(col_chunk, hop - c0)
            for r in range(n_overlap):         # static unroll, typically R = 4
                d = n_overlap - 1 - r
                # Windowed inverse-rFFT of the whole frame window for basis
                # chunk r, staged through a small VMEM buffer so the frame
                # shift below is plain addressed reads (no relayout of the
                # big LHS).
                q_buf[:, 0:cw] = (
                    jnp.dot(a_re, cos_ref[r, :, c0:c0 + cw],
                            preferred_element_type=jnp.float32)
                    + jnp.dot(a_im, sin_ref[r, :, c0:c0 + cw],
                              preferred_element_type=jnp.float32))
                contrib = q_buf[d:d + seg_tile, 0:cw]
                if r == 0:                     # output block doubles as the
                    out_ref[:, c0:c0 + cw] = contrib        # accumulator
                else:
                    out_ref[:, c0:c0 + cw] += contrib
            # Fused envelope normalization (guarded inverse, no inf/NaN).
            out_ref[:, c0:c0 + cw] = (out_ref[:, c0:c0 + cw]
                                      * inv_env_ref[:, c0:c0 + cw])

    return kernel


# ----------------------------------------------------------------------------
# Constant setup (input independent) — numpy, cached per configuration.
# ----------------------------------------------------------------------------
def _window_np(kind, win_length):
    n = np.arange(win_length, dtype=np.float64)
    if kind == "hann":
        return 0.5 - 0.5 * np.cos(2.0 * np.pi * n / win_length)
    if kind == "hamming":
        return 0.54 - 0.46 * np.cos(2.0 * np.pi * n / win_length)
    if kind == "blackman":
        return (0.42 - 0.5 * np.cos(2.0 * np.pi * n / win_length)
                + 0.08 * np.cos(4.0 * np.pi * n / win_length))
    raise ValueError(f"unsupported window {kind!r}")


@functools.lru_cache(maxsize=None)
def _istft_constants(n_fft, hop, win_length, num_frames, seg_tile, ext, window):
    F = n_fft // 2 + 1
    R = n_fft // hop

    # window, center-padded to n_fft (torch.istft behavior for win_length<n_fft)
    w = _window_np(window, win_length)
    wfull = np.zeros(n_fft, np.float64)
    pad_l = (n_fft - win_length) // 2
    wfull[pad_l:pad_l + win_length] = w

    # windowed onesided inverse-rFFT basis split into cos/sin halves and into
    # hop-wide chunks: (R, F, hop) each.
    n = np.arange(n_fft)
    k = np.arange(F)
    ang = 2.0 * np.pi * np.outer(k, n) / n_fft
    wk = np.where((k == 0) | (2 * k == n_fft), 1.0, 2.0)
    cos_b = (wk[:, None] * np.cos(ang)) / n_fft * wfull[None, :]   # (F, n_fft)
    sin_b = (-wk[:, None] * np.sin(ang)) / n_fft * wfull[None, :]  # (F, n_fft)
    cos_b = cos_b.reshape(F, R, hop).transpose(1, 0, 2)            # (R, F, hop)
    sin_b = sin_b.reshape(F, R, hop).transpose(1, 0, 2)

    # segment-grid geometry (output split into hop-sized segments)
    s_total = num_frames + R - 1
    ns = -(-s_total // seg_tile)
    s_pad = ns * seg_tile
    t_pad = s_pad + ext
    total_len = n_fft + hop * (num_frames - 1)

    # overlap-added squared-window envelope, guarded inverse
    env = np.zeros(s_pad * hop, np.float64)
    wsq = wfull * wfull
    for t in range(num_frames):
        env[t * hop:t * hop + n_fft] += wsq
    inv_env = np.where(env > 1e-11, 1.0 / np.maximum(env, 1e-30), 0.0)
    inv_env[total_len:] = 0.0
    inv_env = inv_env.reshape(s_pad, hop)

    return (jnp.asarray(cos_b, jnp.float32),
            jnp.asarray(sin_b, jnp.float32),
            jnp.asarray(inv_env, jnp.float32),
            s_pad, t_pad, ns)


# ----------------------------------------------------------------------------
# Jitted hot path: zero-pad frame axis, one pallas_call, slice trimmed output.
# ----------------------------------------------------------------------------
@functools.partial(jax.jit, static_argnames=(
    "n_fft", "hop", "length", "seg_tile", "n_overlap", "ext",
    "s_pad", "t_pad", "ns"))
def _istft_call(x_real, x_imag, cos_b, sin_b, inv_env, *, n_fft, hop, length,
                seg_tile, n_overlap, ext, s_pad, t_pad, ns):
    B, C, T, F = x_real.shape
    BC = B * C
    R = n_overlap

    # Front pad of R-1 zero frames (so every segment's frame window starts at
    # an in-bounds row), back pad up to t_pad.  Real/imag stay separate inputs
    # (no [Re|Im] concat materialization).
    pad_cfg = ((0, 0), (R - 1, t_pad - (R - 1) - T), (0, 0))
    re = jnp.pad(x_real.reshape(BC, T, F).astype(jnp.float32), pad_cfg)
    im = jnp.pad(x_imag.reshape(BC, T, F).astype(jnp.float32), pad_cfg)

    seg_ext = seg_tile + ext
    col_chunk = hop if hop <= 256 else 256
    tile_per_ext = seg_tile // ext

    kernel = _make_istft_kernel(seg_tile, R, hop, col_chunk)

    # VMEM budget from the real block footprint (auto-pipeline double-buffers
    # every operand block), capped by the physical VMEM of this generation.
    block_bytes = 4 * (2 * seg_ext * F          # re/im main+tail blocks
                       + 2 * R * F * hop        # cos/sin basis blocks
                       + 2 * seg_tile * hop)    # inv_env + out blocks
    vmem_need = (2 * block_bytes
                 + 4 * (2 * seg_ext * F + seg_ext * col_chunk)  # a_re/a_im/q_buf
                 + (4 << 20))                                   # headroom
    vmem_limit = int(min(_vmem_cap_bytes() * 5 // 8, max(8 << 20, vmem_need)))

    out = pl.pallas_call(
        kernel,
        out_shape=jax.ShapeDtypeStruct((BC, s_pad, hop), jnp.float32),
        grid=(BC, ns),
        in_specs=[
            # aligned seg_tile-row frame block of this tile (real part)
            pl.BlockSpec((None, seg_tile, F), lambda i, j: (i, j, 0)),
            # first `ext` rows of the next block (real part)
            pl.BlockSpec((None, ext, F),
                         lambda i, j: (i, (j + 1) * tile_per_ext, 0)),
            # same two windows for the imaginary part
            pl.BlockSpec((None, seg_tile, F), lambda i, j: (i, j, 0)),
            pl.BlockSpec((None, ext, F),
                         lambda i, j: (i, (j + 1) * tile_per_ext, 0)),
            # small windowed irFFT basis (cos / sin), resident across the grid
            pl.BlockSpec((R, F, hop), lambda i, j: (0, 0, 0)),
            pl.BlockSpec((R, F, hop), lambda i, j: (0, 0, 0)),
            # per-segment-tile inverse envelope
            pl.BlockSpec((seg_tile, hop), lambda i, j: (j, 0)),
        ],
        out_specs=pl.BlockSpec((None, seg_tile, hop), lambda i, j: (i, j, 0)),
        scratch_shapes=[pltpu.VMEM((seg_ext, col_chunk), jnp.float32)],
        compiler_params=pltpu.CompilerParams(
            dimension_semantics=("parallel", "parallel"),
            vmem_limit_bytes=vmem_limit),
    )(re, re, im, im, cos_b, sin_b, inv_env)

    # trim center padding (n_fft//2 samples), take `length` samples like torch.
    usable = hop * (T - 1)
    take = min(length, usable)
    y = out.reshape(BC, s_pad * hop)[:, n_fft // 2: n_fft // 2 + take]
    if length > take:
        y = jnp.pad(y, ((0, 0), (0, length - take)))
    return y.reshape(B, C, length)


def istft_pallas(x_stft_real, x_stft_imag, *, n_fft, hop_length=None,
                 win_length=None, window="hann", length=None):
    """x_stft_real / x_stft_imag: (B, C, T, F) with F = n_fft//2 + 1.

    Returns (B, C, length) float32, matching the PyTorch ISTFT module
    (center=True, onesided, default hann window).
    """
    if win_length is None:
        win_length = n_fft
    if hop_length is None:
        hop_length = win_length // 4
    B, C, T, F = x_stft_real.shape
    assert F == n_fft // 2 + 1
    assert n_fft % hop_length == 0, "hop_length must divide n_fft"
    assert win_length <= n_fft
    assert length is not None and length >= 1

    R = n_fft // hop_length
    ext = max(8, _round_up(R - 1, 8))            # frame-window overhang (rows)
    s_total = T + R - 1
    seg_tile = min(128, _round_up(s_total, 8))   # no tiny tiles; pad up instead
    if seg_tile % ext:
        seg_tile = _round_up(seg_tile, ext)

    cos_b, sin_b, inv_env, s_pad, t_pad, ns = _istft_constants(
        n_fft, hop_length, win_length, T, seg_tile, ext, window)

    return _istft_call(x_stft_real, x_stft_imag, cos_b, sin_b, inv_env,
                       n_fft=n_fft, hop=hop_length, length=length,
                       seg_tile=seg_tile, n_overlap=R, ext=ext,
                       s_pad=s_pad, t_pad=t_pad, ns=ns)


# ----------------------------------------------------------------------------
# Pure-JAX reference (independent path: jnp.fft.irfft + explicit overlap-add)
# ----------------------------------------------------------------------------
def istft_ref(x_real, x_imag, *, n_fft, hop_length, win_length,
              window="hann", length=None):
    B, C, T, F = x_real.shape
    w = jnp.asarray(_window_np(window, win_length), jnp.float32)
    pad_l = (n_fft - win_length) // 2
    wfull = jnp.zeros(n_fft, jnp.float32).at[pad_l:pad_l + win_length].set(w)
    spec = x_real.astype(jnp.float32) + 1j * x_imag.astype(jnp.float32)
    frames = jnp.fft.irfft(spec, n=n_fft, axis=-1).astype(jnp.float32) * wfull
    total_len = n_fft + hop_length * (T - 1)
    out = jnp.zeros((B, C, total_len), jnp.float32)
    env = jnp.zeros((total_len,), jnp.float32)
    for t in range(T):
        out = out.at[:, :, t * hop_length:t * hop_length + n_fft].add(
            frames[:, :, t])
        env = env.at[t * hop_length:t * hop_length + n_fft].add(wfull ** 2)
    s = n_fft // 2
    return out[:, :, s:s + length] / env[s:s + length]


if __name__ == "__main__":
    # small, module-consistent shapes
    n_fft = 32
    win_length = 32
    hop_length = win_length // 4            # 8  (module default ratio)
    B, C, T = 2, 4, 12
    F = n_fft // 2 + 1                      # 17
    length = hop_length * (T - 1)           # 88

    key = jax.random.PRNGKey(0)
    k1, k2 = jax.random.split(key)
    x_stft_real = jax.random.normal(k1, (B, C, T, F), dtype=jnp.float32)
    x_stft_imag = jax.random.normal(k2, (B, C, T, F), dtype=jnp.float32)

    y = istft_pallas(x_stft_real, x_stft_imag, n_fft=n_fft,
                     hop_length=hop_length, win_length=win_length,
                     window="hann", length=length)
    y = jax.block_until_ready(y)

    y_ref = istft_ref(x_stft_real, x_stft_imag, n_fft=n_fft,
                      hop_length=hop_length, win_length=win_length,
                      window="hann", length=length)

    assert y.shape == (B, C, length)
    err = float(jnp.max(jnp.abs(y - y_ref)))
    assert jnp.allclose(y, y_ref, atol=1e-4, rtol=1e-4), err
    print("KERNEL_OK")
</pallas_src>

<mosaic_0001>
module attributes {stable_mosaic.version = 11 : i64} {
  func.func @kernel(%arg0: i32, %arg1: i32, %arg2: memref<1x16x17xf32, #tpu.memory_space<vmem>>, %arg3: memref<1x8x17xf32, #tpu.memory_space<vmem>>, %arg4: memref<1x16x17xf32, #tpu.memory_space<vmem>>, %arg5: memref<1x8x17xf32, #tpu.memory_space<vmem>>, %arg6: memref<4x17x8xf32, #tpu.memory_space<vmem>>, %arg7: memref<4x17x8xf32, #tpu.memory_space<vmem>>, %arg8: memref<16x8xf32, #tpu.memory_space<vmem>>, %arg9: memref<1x16x8xf32, #tpu.memory_space<vmem>>, %arg10: memref<24x8xf32, #tpu.memory_space<vmem>>) attributes {dimension_semantics = [#tpu.dimension_semantics<parallel>, #tpu.dimension_semantics<parallel>], iteration_bounds = array<i64: 8, 1>, scalar_prefetch = 0 : i64, scratch_operands = 1 : i64, tpu.core_type = #tpu.core_type<tc>, window_params = [{transform_indices = @transform_0, window_bounds = array<i64: 1, 16, 17>}, {transform_indices = @transform_1, window_bounds = array<i64: 1, 8, 17>}, {transform_indices = @transform_2, window_bounds = array<i64: 1, 16, 17>}, {transform_indices = @transform_3, window_bounds = array<i64: 1, 8, 17>}, {pipeline_mode = #tpu.pipeline_mode<synchronous>, transform_indices = @transform_4, window_bounds = array<i64: 4, 17, 8>}, {pipeline_mode = #tpu.pipeline_mode<synchronous>, transform_indices = @transform_5, window_bounds = array<i64: 4, 17, 8>}, {transform_indices = @transform_6, window_bounds = array<i64: 16, 8>}, {transform_indices = @transform_7, window_bounds = array<i64: 1, 16, 8>}]} {
    %c0 = arith.constant 0 : index
    %c0_0 = arith.constant 0 : index
    %c0_1 = arith.constant 0 : index
    %0 = vector.load %arg2[%c0, %c0_0, %c0_1] : memref<1x16x17xf32, #tpu.memory_space<vmem>>, vector<1x16x17xf32>
    %1 = vector.shape_cast %0 : vector<1x16x17xf32> to vector<16x17xf32>
    %c0_2 = arith.constant 0 : index
    %c0_3 = arith.constant 0 : index
    %c0_4 = arith.constant 0 : index
    %2 = vector.load %arg3[%c0_2, %c0_3, %c0_4] : memref<1x8x17xf32, #tpu.memory_space<vmem>>, vector<1x8x17xf32>
    %3 = vector.shape_cast %2 : vector<1x8x17xf32> to vector<8x17xf32>
    %4 = tpu.concatenate %1, %3 in 0 : vector<16x17xf32>, vector<8x17xf32> -> vector<24x17xf32>
    %c0_5 = arith.constant 0 : index
    %c0_6 = arith.constant 0 : index
    %c0_7 = arith.constant 0 : index
    %5 = vector.load %arg4[%c0_5, %c0_6, %c0_7] : memref<1x16x17xf32, #tpu.memory_space<vmem>>, vector<1x16x17xf32>
    %6 = vector.shape_cast %5 : vector<1x16x17xf32> to vector<16x17xf32>
    %c0_8 = arith.constant 0 : index
    %c0_9 = arith.constant 0 : index
    %c0_10 = arith.constant 0 : index
    %7 = vector.load %arg5[%c0_8, %c0_9, %c0_10] : memref<1x8x17xf32, #tpu.memory_space<vmem>>, vector<1x8x17xf32>
    %8 = vector.shape_cast %7 : vector<1x8x17xf32> to vector<8x17xf32>
    %9 = tpu.concatenate %6, %8 in 0 : vector<16x17xf32>, vector<8x17xf32> -> vector<24x17xf32>
    %c0_11 = arith.constant 0 : index
    %c0_12 = arith.constant 0 : index
    %c0_13 = arith.constant 0 : index
    %10 = vector.load %arg6[%c0_11, %c0_12, %c0_13] : memref<4x17x8xf32, #tpu.memory_space<vmem>>, vector<1x17x8xf32>
    %11 = vector.shape_cast %10 : vector<1x17x8xf32> to vector<17x8xf32>
    %cst = arith.constant dense<0.000000e+00> : vector<24x8xf32>
    %12 = tpu.matmul %4, %11, %cst {dimension_numbers = #tpu.dot_dimension_numbers<[1], [0], [0], [1], [0, 0, 1, 1], [], []>} : vector<24x17xf32>, vector<17x8xf32>, vector<24x8xf32> -> vector<24x8xf32>
    %c0_14 = arith.constant 0 : index
    %c0_15 = arith.constant 0 : index
    %c0_16 = arith.constant 0 : index
    %13 = vector.load %arg7[%c0_14, %c0_15, %c0_16] : memref<4x17x8xf32, #tpu.memory_space<vmem>>, vector<1x17x8xf32>
    %14 = vector.shape_cast %13 : vector<1x17x8xf32> to vector<17x8xf32>
    %cst_17 = arith.constant dense<0.000000e+00> : vector<24x8xf32>
    %15 = tpu.matmul %9, %14, %cst_17 {dimension_numbers = #tpu.dot_dimension_numbers<[1], [0], [0], [1], [0, 0, 1, 1], [], []>} : vector<24x17xf32>, vector<17x8xf32>, vector<24x8xf32> -> vector<24x8xf32>
    %16 = arith.addf %12, %15 : vector<24x8xf32>
    %c0_18 = arith.constant 0 : index
    %c0_19 = arith.constant 0 : index
    %17 = vector.load %arg10[%c0_18, %c0_19] : memref<24x8xf32, #tpu.memory_space<vmem>>, vector<24x8xf32>
    tpu.vector_store %arg10[%c0_18, %c0_19], %16 {strides = array<i32>} : memref<24x8xf32, #tpu.memory_space<vmem>>, vector<24x8xf32>,
    %c3 = arith.constant 3 : index
    %c0_20 = arith.constant 0 : index
    %18 = vector.load %arg10[%c3, %c0_20] : memref<24x8xf32, #tpu.memory_space<vmem>>, vector<16x8xf32>
    %c0_21 = arith.constant 0 : index
    %c0_22 = arith.constant 0 : index
    %c0_23 = arith.constant 0 : index
    %19 = vector.load %arg9[%c0_21, %c0_22, %c0_23] : memref<1x16x8xf32, #tpu.memory_space<vmem>>, vector<1x16x8xf32>
    %20 = vector.shape_cast %19 : vector<1x16x8xf32> to vector<16x8xf32>
    %21 = vector.shape_cast %18 : vector<16x8xf32> to vector<1x16x8xf32>
    tpu.vector_store %arg9[%c0_21, %c0_22, %c0_23], %21 {strides = array<i32>} : memref<1x16x8xf32, #tpu.memory_space<vmem>>, vector<1x16x8xf32>,
    %c1 = arith.constant 1 : index
    %c0_24 = arith.constant 0 : index
    %c0_25 = arith.constant 0 : index
    %22 = vector.load %arg6[%c1, %c0_24, %c0_25] : memref<4x17x8xf32, #tpu.memory_space<vmem>>, vector<1x17x8xf32>
    %23 = vector.shape_cast %22 : vector<1x17x8xf32> to vector<17x8xf32>
    %cst_26 = arith.constant dense<0.000000e+00> : vector<24x8xf32>
    %24 = tpu.matmul %4, %23, %cst_26 {dimension_numbers = #tpu.dot_dimension_numbers<[1], [0], [0], [1], [0, 0, 1, 1], [], []>} : vector<24x17xf32>, vector<17x8xf32>, vector<24x8xf32> -> vector<24x8xf32>
    %c1_27 = arith.constant 1 : index
    %c0_28 = arith.constant 0 : index
    %c0_29 = arith.constant 0 : index
    %25 = vector.load %arg7[%c1_27, %c0_28, %c0_29] : memref<4x17x8xf32, #tpu.memory_space<vmem>>, vector<1x17x8xf32>
    %26 = vector.shape_cast %25 : vector<1x17x8xf32> to vector<17x8xf32>
    %cst_30 = arith.constant dense<0.000000e+00> : vector<24x8xf32>
    %27 = tpu.matmul %9, %26, %cst_30 {dimension_numbers = #tpu.dot_dimension_numbers<[1], [0], [0], [1], [0, 0, 1, 1], [], []>} : vector<24x17xf32>, vector<17x8xf32>, vector<24x8xf32> -> vector<24x8xf32>
    %28 = arith.addf %24, %27 : vector<24x8xf32>
    %c0_31 = arith.constant 0 : index
    %c0_32 = arith.constant 0 : index
    %29 = vector.load %arg10[%c0_31, %c0_32] : memref<24x8xf32, #tpu.memory_space<vmem>>, vector<24x8xf32>
    tpu.vector_store %arg10[%c0_31, %c0_32], %28 {strides = array<i32>} : memref<24x8xf32, #tpu.memory_space<vmem>>, vector<24x8xf32>,
    %c2 = arith.constant 2 : index
    %c0_33 = arith.constant 0 : index
    %30 = vector.load %arg10[%c2, %c0_33] : memref<24x8xf32, #tpu.memory_space<vmem>>, vector<16x8xf32>
    %c0_34 = arith.constant 0 : index
    %c0_35 = arith.constant 0 : index
    %c0_36 = arith.constant 0 : index
    %31 = vector.load %arg9[%c0_34, %c0_35, %c0_36] : memref<1x16x8xf32, #tpu.memory_space<vmem>>, vector<1x16x8xf32>
    %32 = vector.shape_cast %31 : vector<1x16x8xf32> to vector<16x8xf32>
    %33 = arith.addf %32, %30 : vector<16x8xf32>
    %c0_37 = arith.constant 0 : index
    %c0_38 = arith.constant 0 : index
    %c0_39 = arith.constant 0 : index
    %34 = vector.load %arg9[%c0_37, %c0_38, %c0_39] : memref<1x16x8xf32, #tpu.memory_space<vmem>>, vector<1x16x8xf32>
    %35 = vector.shape_cast %34 : vector<1x16x8xf32> to vector<16x8xf32>
    %36 = vector.shape_cast %33 : vector<16x8xf32> to vector<1x16x8xf32>
    tpu.vector_store %arg9[%c0_37, %c0_38, %c0_39], %36 {strides = array<i32>} : memref<1x16x8xf32, #tpu.memory_space<vmem>>, vector<1x16x8xf32>,
    %c2_40 = arith.constant 2 : index
    %c0_41 = arith.constant 0 : index
    %c0_42 = arith.constant 0 : index
    %37 = vector.load %arg6[%c2_40, %c0_41, %c0_42] : memref<4x17x8xf32, #tpu.memory_space<vmem>>, vector<1x17x8xf32>
    %38 = vector.shape_cast %37 : vector<1x17x8xf32> to vector<17x8xf32>
    %cst_43 = arith.constant dense<0.000000e+00> : vector<24x8xf32>
    %39 = tpu.matmul %4, %38, %cst_43 {dimension_numbers = #tpu.dot_dimension_numbers<[1], [0], [0], [1], [0, 0, 1, 1], [], []>} : vector<24x17xf32>, vector<17x8xf32>, vector<24x8xf32> -> vector<24x8xf32>
    %c2_44 = arith.constant 2 : index
    %c0_45 = arith.constant 0 : index
    %c0_46 = arith.constant 0 : index
    %40 = vector.load %arg7[%c2_44, %c0_45, %c0_46] : memref<4x17x8xf32, #tpu.memory_space<vmem>>, vector<1x17x8xf32>
    %41 = vector.shape_cast %40 : vector<1x17x8xf32> to vector<17x8xf32>
    %cst_47 = arith.constant dense<0.000000e+00> : vector<24x8xf32>
    %42 = tpu.matmul %9, %41, %cst_47 {dimension_numbers = #tpu.dot_dimension_numbers<[1], [0], [0], [1], [0, 0, 1, 1], [], []>} : vector<24x17xf32>, vector<17x8xf32>, vector<24x8xf32> -> vector<24x8xf32>
    %43 = arith.addf %39, %42 : vector<24x8xf32>
    %c0_48 = arith.constant 0 : index
    %c0_49 = arith.constant 0 : index
    %44 = vector.load %arg10[%c0_48, %c0_49] : memref<24x8xf32, #tpu.memory_space<vmem>>, vector<24x8xf32>
    tpu.vector_store %arg10[%c0_48, %c0_49], %43 {strides = array<i32>} : memref<24x8xf32, #tpu.memory_space<vmem>>, vector<24x8xf32>,
    %c1_50 = arith.constant 1 : index
    %c0_51 = arith.constant 0 : index
    %45 = vector.load %arg10[%c1_50, %c0_51] : memref<24x8xf32, #tpu.memory_space<vmem>>, vector<16x8xf32>
    %c0_52 = arith.constant 0 : index
    %c0_53 = arith.constant 0 : index
    %c0_54 = arith.constant 0 : index
    %46 = vector.load %arg9[%c0_52, %c0_53, %c0_54] : memref<1x16x8xf32, #tpu.memory_space<vmem>>, vector<1x16x8xf32>
    %47 = vector.shape_cast %46 : vector<1x16x8xf32> to vector<16x8xf32>
    %48 = arith.addf %47, %45 : vector<16x8xf32>
    %c0_55 = arith.constant 0 : index
    %c0_56 = arith.constant 0 : index
    %c0_57 = arith.constant 0 : index
    %49 = vector.load %arg9[%c0_55, %c0_56, %c0_57] : memref<1x16x8xf32, #tpu.memory_space<vmem>>, vector<1x16x8xf32>
    %50 = vector.shape_cast %49 : vector<1x16x8xf32> to vector<16x8xf32>
    %51 = vector.shape_cast %48 : vector<16x8xf32> to vector<1x16x8xf32>
    tpu.vector_store %arg9[%c0_55, %c0_56, %c0_57], %51 {strides = array<i32>} : memref<1x16x8xf32, #tpu.memory_space<vmem>>, vector<1x16x8xf32>,
    %c3_58 = arith.constant 3 : index
    %c0_59 = arith.constant 0 : index
    %c0_60 = arith.constant 0 : index
    %52 = vector.load %arg6[%c3_58, %c0_59, %c0_60] : memref<4x17x8xf32, #tpu.memory_space<vmem>>, vector<1x17x8xf32>
    %53 = vector.shape_cast %52 : vector<1x17x8xf32> to vector<17x8xf32>
    %cst_61 = arith.constant dense<0.000000e+00> : vector<24x8xf32>
    %54 = tpu.matmul %4, %53, %cst_61 {dimension_numbers = #tpu.dot_dimension_numbers<[1], [0], [0], [1], [0, 0, 1, 1], [], []>} : vector<24x17xf32>, vector<17x8xf32>, vector<24x8xf32> -> vector<24x8xf32>
    %c3_62 = arith.constant 3 : index
    %c0_63 = arith.constant 0 : index
    %c0_64 = arith.constant 0 : index
    %55 = vector.load %arg7[%c3_62, %c0_63, %c0_64] : memref<4x17x8xf32, #tpu.memory_space<vmem>>, vector<1x17x8xf32>
    %56 = vector.shape_cast %55 : vector<1x17x8xf32> to vector<17x8xf32>
    %cst_65 = arith.constant dense<0.000000e+00> : vector<24x8xf32>
    %57 = tpu.matmul %9, %56, %cst_65 {dimension_numbers = #tpu.dot_dimension_numbers<[1], [0], [0], [1], [0, 0, 1, 1], [], []>} : vector<24x17xf32>, vector<17x8xf32>, vector<24x8xf32> -> vector<24x8xf32>
    %58 = arith.addf %54, %57 : vector<24x8xf32>
    %c0_66 = arith.constant 0 : index
    %c0_67 = arith.constant 0 : index
    %59 = vector.load %arg10[%c0_66, %c0_67] : memref<24x8xf32, #tpu.memory_space<vmem>>, vector<24x8xf32>
    tpu.vector_store %arg10[%c0_66, %c0_67], %58 {strides = array<i32>} : memref<24x8xf32, #tpu.memory_space<vmem>>, vector<24x8xf32>,
    %c0_68 = arith.constant 0 : index
    %c0_69 = arith.constant 0 : index
    %60 = vector.load %arg10[%c0_68, %c0_69] : memref<24x8xf32, #tpu.memory_space<vmem>>, vector<16x8xf32>
    %c0_70 = arith.constant 0 : index
    %c0_71 = arith.constant 0 : index
    %c0_72 = arith.constant 0 : index
    %61 = vector.load %arg9[%c0_70, %c0_71, %c0_72] : memref<1x16x8xf32, #tpu.memory_space<vmem>>, vector<1x16x8xf32>
    %62 = vector.shape_cast %61 : vector<1x16x8xf32> to vector<16x8xf32>
    %63 = arith.addf %62, %60 : vector<16x8xf32>
    %c0_73 = arith.constant 0 : index
    %c0_74 = arith.constant 0 : index
    %c0_75 = arith.constant 0 : index
    %64 = vector.load %arg9[%c0_73, %c0_74, %c0_75] : memref<1x16x8xf32, #tpu.memory_space<vmem>>, vector<1x16x8xf32>
    %65 = vector.shape_cast %64 : vector<1x16x8xf32> to vector<16x8xf32>
    %66 = vector.shape_cast %63 : vector<16x8xf32> to vector<1x16x8xf32>
    tpu.vector_store %arg9[%c0_73, %c0_74, %c0_75], %66 {strides = array<i32>} : memref<1x16x8xf32, #tpu.memory_space<vmem>>, vector<1x16x8xf32>,
    %c0_76 = arith.constant 0 : index
    %c0_77 = arith.constant 0 : index
    %c0_78 = arith.constant 0 : index
    %67 = vector.load %arg9[%c0_76, %c0_77, %c0_78] : memref<1x16x8xf32, #tpu.memory_space<vmem>>, vector<1x16x8xf32>
    %68 = vector.shape_cast %67 : vector<1x16x8xf32> to vector<16x8xf32>
    %c0_79 = arith.constant 0 : index
    %c0_80 = arith.constant 0 : index
    %69 = vector.load %arg8[%c0_79, %c0_80] : memref<16x8xf32, #tpu.memory_space<vmem>>, vector<16x8xf32>
    %70 = arith.mulf %68, %69 : vector<16x8xf32>
    %c0_81 = arith.constant 0 : index
    %c0_82 = arith.constant 0 : index
    %c0_83 = arith.constant 0 : index
    %71 = vector.load %arg9[%c0_81, %c0_82, %c0_83] : memref<1x16x8xf32, #tpu.memory_space<vmem>>, vector<1x16x8xf32>
    %72 = vector.shape_cast %71 : vector<1x16x8xf32> to vector<16x8xf32>
    %73 = vector.shape_cast %70 : vector<16x8xf32> to vector<1x16x8xf32>
    tpu.vector_store %arg9[%c0_81, %c0_82, %c0_83], %73 {strides = array<i32>} : memref<1x16x8xf32, #tpu.memory_space<vmem>>, vector<1x16x8xf32>,
    return
  }
  func.func @transform_0(%arg0: i32, %arg1: i32) -> (i32, i32, i32) {
    %c0_i32 = arith.constant 0 : i32
    %c0_i32_0 = arith.constant 0 : i32
    return %arg0, %arg1, %c0_i32 : i32, i32, i32
  }
  func.func @transform_1(%arg0: i32, %arg1: i32) -> (i32, i32, i32) {
    %c1_i32 = arith.constant 1 : i32
    %0 = arith.addi %arg1, %c1_i32 : i32
    %c2_i32 = arith.constant 2 : i32
    %1 = arith.muli %0, %c2_i32 : i32
    %c0_i32 = arith.constant 0 : i32
    %c0_i32_0 = arith.constant 0 : i32
    return %arg0, %1, %c0_i32 : i32, i32, i32
  }
  func.func @transform_2(%arg0: i32, %arg1: i32) -> (i32, i32, i32) {
    %c0_i32 = arith.constant 0 : i32
    %c0_i32_0 = arith.constant 0 : i32
    return %arg0, %arg1, %c0_i32 : i32, i32, i32
  }
  func.func @transform_3(%arg0: i32, %arg1: i32) -> (i32, i32, i32) {
    %c1_i32 = arith.constant 1 : i32
    %0 = arith.addi %arg1, %c1_i32 : i32
    %c2_i32 = arith.constant 2 : i32
    %1 = arith.muli %0, %c2_i32 : i32
    %c0_i32 = arith.constant 0 : i32
    %c0_i32_0 = arith.constant 0 : i32
    return %arg0, %1, %c0_i32 : i32, i32, i32
  }
  func.func @transform_4(%arg0: i32, %arg1: i32) -> (i32, i32, i32) {
    %c0_i32 = arith.constant 0 : i32
    %c0_i32_0 = arith.constant 0 : i32
    %c0_i32_1 = arith.constant 0 : i32
    %c0_i32_2 = arith.constant 0 : i32
    return %c0_i32, %c0_i32_0, %c0_i32_1 : i32, i32, i32
  }
  func.func @transform_5(%arg0: i32, %arg1: i32) -> (i32, i32, i32) {
    %c0_i32 = arith.constant 0 : i32
    %c0_i32_0 = arith.constant 0 : i32
    %c0_i32_1 = arith.constant 0 : i32
    %c0_i32_2 = arith.constant 0 : i32
    return %c0_i32, %c0_i32_0, %c0_i32_1 : i32, i32, i32
  }
  func.func @transform_6(%arg0: i32, %arg1: i32) -> (i32, i32) {
    %c0_i32 = arith.constant 0 : i32
    %c0_i32_0 = arith.constant 0 : i32
    return %arg1, %c0_i32 : i32, i32
  }
  func.func @transform_7(%arg0: i32, %arg1: i32) -> (i32, i32, i32) {
    %c0_i32 = arith.constant 0 : i32
    %c0_i32_0 = arith.constant 0 : i32
    return %arg0, %arg1, %c0_i32 : i32, i32, i32
  }
}

</mosaic_0001>

<llo_original>
// kernel: _istft_call.1
$region0: #{_istft_call.1}
  #allocation0 [shape = 'u32[]', space=smem, size = 0x4, offset = 0x4, fixed_abs, tag = 'smem constant byte address 0x4 - core index']
  #allocation1 [shape = 'u32[72,128]{1,0:T(1,128)}', space=vmem, size = 0x9000, scoped, tag = 'internal scratch']
  #allocation2 [shape = 'f32[24,8]{1,0:T(8,128)}', space=vmem, size = 0x3000, scoped, tag = 'scratch operand']
  %s0 = inlined_call_operand.vmem [shape: f32[8,24,17], index: 0, kind: input, shape index: {}, may-alias: {0,1}]
  %s1 = inlined_call_operand.vmem [shape: f32[8,24,17], index: 1, kind: input, shape index: {}, may-alias: {0,1}]
  %s2 = inlined_call_operand.vmem [shape: f32[8,24,17], index: 2, kind: input, shape index: {}, may-alias: {2,3}]
  %s3 = inlined_call_operand.vmem [shape: f32[8,24,17], index: 3, kind: input, shape index: {}, may-alias: {2,3}]
  %s4 = inlined_call_operand.vmem [shape: f32[4,17,8], index: 4, kind: input, shape index: {}]
  %s5 = inlined_call_operand.vmem [shape: f32[4,17,8], index: 5, kind: input, shape index: {}]
  %s6 = inlined_call_operand.vmem [shape: f32[16,8], index: 6, kind: input, shape index: {}]
  %s7 = inlined_call_operand.vmem [shape: f32[8,16,8], index: 7, kind: output, shape index: {}]
  %s8 = sld [smem:[#allocation0]]
  $region61: #{_istft_call.1} parent=0
    _
  %s10 = ssub.s32 1, %s8
  %s11 = scalar_select 0, %s10, %s8
  loop: start=0, step=1, limit=10
  $region2: #{_istft_call.1} parent=0 // loop_pre_header
    _
  $region3: #{_istft_call.1} parent=0 // loop_header
    %s13 = sphi 0, %s17
    %p14 = scmp.ge.s32.totalorder %s13, 10
    %s20 = sphi 0, %s32
    %s21 = sphi 0, %s28
    %s22 = sphi 0, %s20
    %s23 = sphi 0, %s21
    %s24 = sphi 0, %s22
    %s25 = sphi 0, %s23
    %s37 = sphi 0, %s39
    %s40 = sphi 0, %s37
    %s41 = sphi 0, %s40
    %s57 = sphi 0, %s41
    %s69 = sphi 0, %s71
    %s72 = sphi 0, %s69
    %s73 = sphi 0, %s72
    %s89 = sphi 0, %s73
    %s97 = sphi 0, %s99
    %s100 = sphi 0, %s97
    %s101 = sphi 0, %s100
    %s117 = sphi 0, %s101
    %s129 = sphi 0, %s131
    %s132 = sphi 0, %s129
    %s133 = sphi 0, %s132
    %s149 = sphi 0, %s133
    %s153 = sphi 0, %s153
    %s155 = sphi 0, %s153
    %s156 = sphi 0, %s155
    %s170 = sphi 0, %s156
    %s174 = sphi 0, %s174
    %s176 = sphi 0, %s174
    %s177 = sphi 0, %s176
    %s191 = sphi 0, %s177
    %s197 = sphi 0, %s199
    %s200 = sphi 0, %s197
    %s201 = sphi 0, %s200
    %s217 = sphi 0, %s201
    %s225 = sphi 0, %s227
    %s228 = sphi 0, %s225
    %s229 = sphi 0, %s228
    %s245 = sphi 0, %s229
  $region4: #{_istft_call.1} parent=0 // loop_header_branch
    %16 = sbr.rel (%p14) target = $region8
  $region5: #{_istft_call.1} parent=0 // loop_body
    %s18 = ssub.s32 %s13, 1
    %s19 = ssub.s32 %s13, 2
    %s26 = sadd.s32 1, %s21
    %p27 = scmp.ge.s32.totalorder %s26, 1
    %s28 = scalar_select %p27, 0, %s26
    %s29 = sadd.s32 1, %s20
    %s30 = scalar_select %p27, %s29, %s20
    %p31 = scmp.ge.s32.totalorder %s30, 8
    %s32 = scalar_select %p31, 0, %s30
    %s33 = ssub.s32 %s20, %s32
    %s34 = ssub.s32 %s21, %s28
    %s35 = sor.u32 %s33, %s34
    %p36 = scmp.eq.s32.totalorder %s35, 0
    %s38 = sadd.s32 %s37, 1
    %s39 = scalar_select %p36, %s37, %s38
    %p42 = pneg %p36
    %p43 = scmp.eq.s32.totalorder %s13, 7
    %p44 = por %p42, %p43
    %p45 = scmp.ne.s32.totalorder %s37, %s40
    %p46 = scmp.eq.s32.totalorder %s13, 0
    %p47 = por %p45, %p46
    %p48 = scmp.ne.s32.totalorder %s37, %s40
    %p49 = scmp.eq.s32.totalorder %s18, 7
    %p50 = por %p48, %p49
    %p51 = scmp.ne.s32.totalorder %s40, %s41
    %p52 = scmp.eq.s32.totalorder %s18, 0
    %p53 = por %p51, %p52
    %p54 = scmp.ne.s32.totalorder %s40, %s41
    %p55 = scmp.eq.s32.totalorder %s19, 7
    %p56 = por %p54, %p55
    %p58 = scmp.ne.s32.totalorder %s41, %s57
    %p59 = scmp.eq.s32.totalorder %s19, 0
    %p60 = por %p58, %p59
    %s61 = sadd.s32 %s21, 1
    %s62 = smul.u32 %s61, 2
    %s63 = sadd.s32 %s28, 1
    %s64 = smul.u32 %s63, 2
    %s65 = ssub.s32 %s20, %s32
    %s66 = ssub.s32 %s62, %s64
    %s67 = sor.u32 %s65, %s66
    %p68 = scmp.eq.s32.totalorder %s67, 0
    %s70 = sadd.s32 %s69, 1
    %s71 = scalar_select %p68, %s69, %s70
    %p74 = pneg %p68
    %p75 = scmp.eq.s32.totalorder %s13, 7
    %p76 = por %p74, %p75
    %p77 = scmp.ne.s32.totalorder %s69, %s72
    %p78 = scmp.eq.s32.totalorder %s13, 0
    %p79 = por %p77, %p78
    %p80 = scmp.ne.s32.totalorder %s69, %s72
    %p81 = scmp.eq.s32.totalorder %s18, 7
    %p82 = por %p80, %p81
    %p83 = scmp.ne.s32.totalorder %s72, %s73
    %p84 = scmp.eq.s32.totalorder %s18, 0
    %p85 = por %p83, %p84
    %p86 = scmp.ne.s32.totalorder %s72, %s73
    %p87 = scmp.eq.s32.totalorder %s19, 7
    %p88 = por %p86, %p87
    %p90 = scmp.ne.s32.totalorder %s73, %s89
    %p91 = scmp.eq.s32.totalorder %s19, 0
    %p92 = por %p90, %p91
    %s93 = ssub.s32 %s20, %s32
    %s94 = ssub.s32 %s21, %s28
    %s95 = sor.u32 %s93, %s94
    %p96 = scmp.eq.s32.totalorder %s95, 0
    %s98 = sadd.s32 %s97, 1
    %s99 = scalar_select %p96, %s97, %s98
    %p102 = pneg %p96
    %p103 = scmp.eq.s32.totalorder %s13, 7
    %p104 = por %p102, %p103
    %p105 = scmp.ne.s32.totalorder %s97, %s100
    %p106 = scmp.eq.s32.totalorder %s13, 0
    %p107 = por %p105, %p106
    %p108 = scmp.ne.s32.totalorder %s97, %s100
    %p109 = scmp.eq.s32.totalorder %s18, 7
    %p110 = por %p108, %p109
    %p111 = scmp.ne.s32.totalorder %s100, %s101
    %p112 = scmp.eq.s32.totalorder %s18, 0
    %p113 = por %p111, %p112
    %p114 = scmp.ne.s32.totalorder %s100, %s101
    %p115 = scmp.eq.s32.totalorder %s19, 7
    %p116 = por %p114, %p115
    %p118 = scmp.ne.s32.totalorder %s101, %s117
    %p119 = scmp.eq.s32.totalorder %s19, 0
    %p120 = por %p118, %p119
    %s121 = sadd.s32 %s21, 1
    %s122 = smul.u32 %s121, 2
    %s123 = sadd.s32 %s28, 1
    %s124 = smul.u32 %s123, 2
    %s125 = ssub.s32 %s20, %s32
    %s126 = ssub.s32 %s122, %s124
    %s127 = sor.u32 %s125, %s126
    %p128 = scmp.eq.s32.totalorder %s127, 0
    %s130 = sadd.s32 %s129, 1
    %s131 = scalar_select %p128, %s129, %s130
    %p134 = pneg %p128
    %p135 = scmp.eq.s32.totalorder %s13, 7
    %p136 = por %p134, %p135
    %p137 = scmp.ne.s32.totalorder %s129, %s132
    %p138 = scmp.eq.s32.totalorder %s13, 0
    %p139 = por %p137, %p138
    %p140 = scmp.ne.s32.totalorder %s129, %s132
    %p141 = scmp.eq.s32.totalorder %s18, 7
    %p142 = por %p140, %p141
    %p143 = scmp.ne.s32.totalorder %s132, %s133
    %p144 = scmp.eq.s32.totalorder %s18, 0
    %p145 = por %p143, %p144
    %p146 = scmp.ne.s32.totalorder %s132, %s133
    %p147 = scmp.eq.s32.totalorder %s19, 7
    %p148 = por %p146, %p147
    %p150 = scmp.ne.s32.totalorder %s133, %s149
    %p151 = scmp.eq.s32.totalorder %s19, 0
    %p152 = por %p150, %p151
    %s154 = sadd.s32 %s153, 1
    %p157 = scmp.eq.s32.totalorder %s13, 7
    %p158 = scmp.ne.s32.totalorder %s153, %s155
    %p159 = scmp.eq.s32.totalorder %s13, 0
    %p160 = por %p158, %p159
    %p161 = scmp.ne.s32.totalorder %s153, %s155
    %p162 = scmp.eq.s32.totalorder %s18, 7
    %p163 = por %p161, %p162
    %p164 = scmp.ne.s32.totalorder %s155, %s156
    %p165 = scmp.eq.s32.totalorder %s18, 0
    %p166 = por %p164, %p165
    %p167 = scmp.ne.s32.totalorder %s155, %s156
    %p168 = scmp.eq.s32.totalorder %s19, 7
    %p169 = por %p167, %p168
    %p171 = scmp.ne.s32.totalorder %s156, %s170
    %p172 = scmp.eq.s32.totalorder %s19, 0
    %p173 = por %p171, %p172
    %s175 = sadd.s32 %s174, 1
    %p178 = scmp.eq.s32.totalorder %s13, 7
    %p179 = scmp.ne.s32.totalorder %s174, %s176
    %p180 = scmp.eq.s32.totalorder %s13, 0
    %p181 = por %p179, %p180
    %p182 = scmp.ne.s32.totalorder %s174, %s176
    %p183 = scmp.eq.s32.totalorder %s18, 7
    %p184 = por %p182, %p183
    %p185 = scmp.ne.s32.totalorder %s176, %s177
    %p186 = scmp.eq.s32.totalorder %s18, 0
    %p187 = por %p185, %p186
    %p188 = scmp.ne.s32.totalorder %s176, %s177
    %p189 = scmp.eq.s32.totalorder %s19, 7
    %p190 = por %p188, %p189
    %p192 = scmp.ne.s32.totalorder %s177, %s191
    %p193 = scmp.eq.s32.totalorder %s19, 0
    %p194 = por %p192, %p193
    %s195 = ssub.s32 %s21, %s28
    %p196 = scmp.eq.s32.totalorder %s195, 0
    %s198 = sadd.s32 %s197, 1
    %s199 = scalar_select %p196, %s197, %s198
    %p202 = pneg %p196
    %p203 = scmp.eq.s32.totalorder %s13, 7
    %p204 = por %p202, %p203
    %p205 = scmp.ne.s32.totalorder %s197, %s200
    %p206 = scmp.eq.s32.totalorder %s13, 0
    %p207 = por %p205, %p206
    %p208 = scmp.ne.s32.totalorder %s197, %s200
    %p209 = scmp.eq.s32.totalorder %s18, 7
    %p210 = por %p208, %p209
    %p211 = scmp.ne.s32.totalorder %s200, %s201
    %p212 = scmp.eq.s32.totalorder %s18, 0
    %p213 = por %p211, %p212
    %p214 = scmp.ne.s32.totalorder %s200, %s201
    %p215 = scmp.eq.s32.totalorder %s19, 7
    %p216 = por %p214, %p215
    %p218 = scmp.ne.s32.totalorder %s201, %s217
    %p219 = scmp.eq.s32.totalorder %s19, 0
    %p220 = por %p218, %p219
    %s221 = ssub.s32 %s20, %s32
    %s222 = ssub.s32 %s21, %s28
    %s223 = sor.u32 %s221, %s222
    %p224 = scmp.eq.s32.totalorder %s223, 0
    %s226 = sadd.s32 %s225, 1
    %s227 = scalar_select %p224, %s225, %s226
    %p230 = pneg %p224
    %p231 = scmp.eq.s32.totalorder %s13, 7
    %p232 = por %p230, %p231
    %p233 = scmp.ne.s32.totalorder %s225, %s228
    %p234 = scmp.eq.s32.totalorder %s13, 0
    %p235 = por %p233, %p234
    %p236 = scmp.ne.s32.totalorder %s225, %s228
    %p237 = scmp.eq.s32.totalorder %s18, 7
    %p238 = por %p236, %p237
    %p239 = scmp.ne.s32.totalorder %s228, %s229
    %p240 = scmp.eq.s32.totalorder %s18, 0
    %p241 = por %p239, %p240
    %p242 = scmp.ne.s32.totalorder %s228, %s229
    %p243 = scmp.eq.s32.totalorder %s19, 7
    %p244 = por %p242, %p243
    %p246 = scmp.ne.s32.totalorder %s229, %s245
    %p247 = scmp.eq.s32.totalorder %s19, 0
    %p248 = por %p246, %p247
    %p249 = scmp.le.s32.totalorder 1, %s13
    %p250 = scmp.lt.s32.totalorder %s13, 9
    %p251 = pnand %p249, %p250
    %p252 = pneg %p251
    // Predicated region
    $region9: #{_istft_call.1} parent=5 // pred_check
      _
    $region10: #{_istft_call.1} parent=5 // pred_check_branch
      %254 = sbr.rel (%p251) target = $region12
    $region11: #{_istft_call.1} parent=5 // pred_region
      %s255 = ssub.s32 %s13, 1
      // Predicated region
      $region13: #{_istft_call.1} parent=11 // pred_check
        %p256 = pneg %p166
      $region14: #{_istft_call.1} parent=11 // pred_check_branch
        %258 = sbr.rel (%p256) target = $region16
      $region15: #{_istft_call.1} parent=11 // pred_region
        _
      $region16: #{_istft_call.1} parent=11 // pred_fallthru
        _
      // Predicated region
      $region17: #{_istft_call.1} parent=11 // pred_check
        %p259 = pneg %p187
      $region18: #{_istft_call.1} parent=11 // pred_check_branch
        %261 = sbr.rel (%p259) target = $region20
      $region19: #{_istft_call.1} parent=11 // pred_region
        _
      $region20: #{_istft_call.1} parent=11 // pred_fallthru
        _
      // Predicated region
      $region21: #{_istft_call.1} parent=11 // pred_check
        %p262 = pneg %p213
      $region22: #{_istft_call.1} parent=11 // pred_check_branch
        %264 = sbr.rel (%p262) target = $region24
      $region23: #{_istft_call.1} parent=11 // pred_region
        %s265 = smul.u32 2, %s23
        %p266 = scmp.lt.s32.totalorder %s265, 1
        %s267 = scalar_select %p266, %s265, 1
        %s268 = smul.addr %s267, 8
        %s269 = scalar_lea.vmem %s6, %s268
        %s270 = smul.u32 2, %s23
      $region24: #{_istft_call.1} parent=11 // pred_fallthru
        _
    $region12: #{_istft_call.1} parent=5 // pred_fallthru
      _
    %p271 = scmp.lt.s32.totalorder %s13, 8
    // Predicated region
    $region25: #{_istft_call.1} parent=5 // pred_check
      %p272 = pneg %p271
    $region26: #{_istft_call.1} parent=5 // pred_check_branch
      %274 = sbr.rel (%p272) target = $region28
    $region27: #{_istft_call.1} parent=5 // pred_region
      // Predicated region
      $region29: #{_istft_call.1} parent=27 // pred_check
        %p275 = pneg %p47
      $region30: #{_istft_call.1} parent=27 // pred_check_branch
        %277 = sbr.rel (%p275) target = $region32
      $region31: #{_istft_call.1} parent=27 // pred_region
        %s278 = smul.u32 2, %s21
        %s279 = ssub.s32 3, %s278
        %p280 = scmp.lt.s32.totalorder %s279, 2
        %s281 = scalar_select %p280, %s279, 2
        %s282 = smul.u32 8, %s281
        %p283 = scmp.lt.s32.totalorder %s20, 7
        %s284 = scalar_select %p283, %s20, 7
        %p285 = scmp.lt.s32.totalorder %s278, 2
        %s286 = scalar_select %p285, %s278, 2
        %s287 = smul.addr %s284, 3
        %s288 = sadd.s32 %s286, %s287
        %s289 = smul.addr %s288, 8
        %s290 = scalar_lea.vmem %s0, %s289
        %s291 = smul.u32 2, %s21
        %s292 = ssub.s32 3, %s291
        %p293 = scmp.lt.s32.totalorder %s292, 2
        %s294 = scalar_select %p293, %s292, 2
        %s295 = smul.u32 8, %s294
      $region32: #{_istft_call.1} parent=27 // pred_fallthru
        _
      // Predicated region
      $region33: #{_istft_call.1} parent=27 // pred_check
        %p296 = pneg %p79
      $region34: #{_istft_call.1} parent=27 // pred_check_branch
        %298 = sbr.rel (%p296) target = $region36
      $region35: #{_istft_call.1} parent=27 // pred_region
        %s299 = sadd.s32 %s21, 1
        %s300 = smul.u32 %s299, 2
        %p301 = scmp.lt.s32.totalorder %s20, 7
        %s302 = scalar_select %p301, %s20, 7
        %p303 = scmp.lt.s32.totalorder %s300, 2
        %s304 = scalar_select %p303, %s300, 2
        %s305 = smul.addr %s302, 3
        %s306 = sadd.s32 %s304, %s305
        %s307 = smul.addr %s306, 8
        %s308 = scalar_lea.vmem %s1, %s307
        %s309 = sadd.s32 %s21, 1
        %s310 = smul.u32 %s309, 2
      $region36: #{_istft_call.1} parent=27 // pred_fallthru
        _
      // Predicated region
      $region37: #{_istft_call.1} parent=27 // pred_check
        %p311 = pneg %p107
      $region38: #{_istft_call.1} parent=27 // pred_check_branch
        %313 = sbr.rel (%p311) target = $region40
      $region39: #{_istft_call.1} parent=27 // pred_region
        %s314 = smul.u32 2, %s21
        %s315 = ssub.s32 3, %s314
        %p316 = scmp.lt.s32.totalorder %s315, 2
        %s317 = scalar_select %p316, %s315, 2
        %s318 = smul.u32 8, %s317
        %p319 = scmp.lt.s32.totalorder %s20, 7
        %s320 = scalar_select %p319, %s20, 7
        %p321 = scmp.lt.s32.totalorder %s314, 2
        %s322 = scalar_select %p321, %s314, 2
        %s323 = smul.addr %s320, 3
        %s324 = sadd.s32 %s322, %s323
        %s325 = smul.addr %s324, 8
        %s326 = scalar_lea.vmem %s2, %s325
        %s327 = smul.u32 2, %s21
        %s328 = ssub.s32 3, %s327
        %p329 = scmp.lt.s32.totalorder %s328, 2
        %s330 = scalar_select %p329, %s328, 2
        %s331 = smul.u32 8, %s330
      $region40: #{_istft_call.1} parent=27 // pred_fallthru
        _
      // Predicated region
      $region41: #{_istft_call.1} parent=27 // pred_check
        %p332 = pneg %p139
      $region42: #{_istft_call.1} parent=27 // pred_check_branch
        %334 = sbr.rel (%p332) target = $region44
      $region43: #{_istft_call.1} parent=27 // pred_region
        %s335 = sadd.s32 %s21, 1
        %s336 = smul.u32 %s335, 2
        %p337 = scmp.lt.s32.totalorder %s20, 7
        %s338 = scalar_select %p337, %s20, 7
        %p339 = scmp.lt.s32.totalorder %s336, 2
        %s340 = scalar_select %p339, %s336, 2
        %s341 = smul.addr %s338, 3
        %s342 = sadd.s32 %s340, %s341
        %s343 = smul.addr %s342, 8
        %s344 = scalar_lea.vmem %s3, %s343
        %s345 = sadd.s32 %s21, 1
        %s346 = smul.u32 %s345, 2
      $region44: #{_istft_call.1} parent=27 // pred_fallthru
        _
    $region28: #{_istft_call.1} parent=5 // pred_fallthru
      _
    %p347 = scmp.le.s32.totalorder 1, %s13
    %p348 = scmp.lt.s32.totalorder %s13, 9
    %p349 = pnand %p347, %p348
    %p350 = pneg %p349
    // Predicated region
    $region45: #{_istft_call.1} parent=5 // pred_check
      _
    $region46: #{_istft_call.1} parent=5 // pred_check_branch
      %352 = sbr.rel (%p349) target = $region48
    $region47: #{_istft_call.1} parent=5 // pred_region
      %s353 = ssub.s32 %s13, 1
      %s354 = smul.u32 2, %s23
      %s355 = ssub.s32 3, %s354
      %p356 = scmp.lt.s32.totalorder %s355, 2
      %s357 = scalar_select %p356, %s355, 2
      %s358 = smul.u32 8, %s357
      %p359 = scmp.lt.s32.totalorder %s22, 7
      %s360 = scalar_select %p359, %s22, 7
      %p361 = scmp.lt.s32.totalorder %s354, 2
      %s362 = scalar_select %p361, %s354, 2
      %s363 = smul.addr %s360, 3
      %s364 = sadd.s32 %s362, %s363
      %s365 = smul.addr %s364, 8
      %s366 = scalar_lea.vmem %s0, %s365
      %p367 = pneg %p53
      %p368 = pneg %p50
      %s369 = sadd.s32 %s23, 1
      %s370 = smul.u32 %s369, 2
      %p371 = scmp.lt.s32.totalorder %s22, 7
      %s372 = scalar_select %p371, %s22, 7
      %p373 = scmp.lt.s32.totalorder %s370, 2
      %s374 = scalar_select %p373, %s370, 2
      %s375 = smul.addr %s372, 3
      %s376 = sadd.s32 %s374, %s375
      %s377 = smul.addr %s376, 8
      %s378 = scalar_lea.vmem %s1, %s377
      %p379 = pneg %p85
      %p380 = pneg %p82
      %s381 = smul.u32 2, %s23
      %s382 = ssub.s32 3, %s381
      %p383 = scmp.lt.s32.totalorder %s382, 2
      %s384 = scalar_select %p383, %s382, 2
      %s385 = smul.u32 8, %s384
      %p386 = scmp.lt.s32.totalorder %s22, 7
      %s387 = scalar_select %p386, %s22, 7
      %p388 = scmp.lt.s32.totalorder %s381, 2
      %s389 = scalar_select %p388, %s381, 2
      %s390 = smul.addr %s387, 3
      %s391 = sadd.s32 %s389, %s390
      %s392 = smul.addr %s391, 8
      %s393 = scalar_lea.vmem %s2, %s392
      %p394 = pneg %p113
      %p395 = pneg %p110
      %s396 = sadd.s32 %s23, 1
      %s397 = smul.u32 %s396, 2
      %p398 = scmp.lt.s32.totalorder %s22, 7
      %s399 = scalar_select %p398, %s22, 7
      %p400 = scmp.lt.s32.totalorder %s397, 2
      %s401 = scalar_select %p400, %s397, 2
      %s402 = smul.addr %s399, 3
      %s403 = sadd.s32 %s401, %s402
      %s404 = smul.addr %s403, 8
      %s405 = scalar_lea.vmem %s3, %s404
      %p406 = pneg %p145
      %p407 = pneg %p142
      %p408 = pneg %p166
      %p409 = pneg %p163
      %p410 = pneg %p187
      %p411 = pneg %p184
      %s412 = smul.u32 2, %s23
      %p413 = scmp.lt.s32.totalorder %s412, 1
      %s414 = scalar_select %p413, %s412, 1
      %s415 = smul.addr %s414, 8
      %s416 = scalar_lea.vmem %s6, %s415
      %p417 = pneg %p213
      %p418 = pneg %p210
      %p419 = pneg %p241
      %p420 = pneg %p238
      %s421 = smul.u32 2, %s23
      %p422 = scmp.lt.s32.totalorder %s22, 7
      %s423 = scalar_select %p422, %s22, 7
      %p424 = scmp.lt.s32.totalorder %s421, 1
      %s425 = scalar_select %p424, %s421, 1
      %s426 = smul.addr %s423, 2
      %s427 = sadd.s32 %s425, %s426
      %s428 = smul.addr %s427, 8
      %s429 = scalar_lea.vmem %s7, %s428
      %s430 = smul.u32 2, %s23
      %s431 = ssub.s32 3, %s430
      %p432 = scmp.lt.s32.totalorder %s431, 2
      %s433 = scalar_select %p432, %s431, 2
      %s434 = smul.u32 8, %s433
      %p435 = scmp.lt.s32.totalorder %s22, 7
      %s436 = scalar_select %p435, %s22, 7
      %p437 = scmp.lt.s32.totalorder %s430, 2
      %s438 = scalar_select %p437, %s430, 2
      %s439 = smul.addr %s436, 3
      %s440 = sadd.s32 %s438, %s439
      %s441 = smul.addr %s440, 8
      %s442 = scalar_lea.vmem %s0, %s441
      %s443 = smul.u32 2, %s23
      %s444 = ssub.s32 3, %s443
      %p445 = scmp.lt.s32.totalorder %s444, 2
      %s446 = scalar_select %p445, %s444, 2
      %s447 = smul.u32 8, %s446
      %s448 = sadd.s32 %s23, 1
      %s449 = smul.u32 %s448, 2
      %p450 = scmp.lt.s32.totalorder %s22, 7
      %s451 = scalar_select %p450, %s22, 7
      %p452 = scmp.lt.s32.totalorder %s449, 2
      %s453 = scalar_select %p452, %s449, 2
      %s454 = smul.addr %s451, 3
      %s455 = sadd.s32 %s453, %s454
      %s456 = smul.addr %s455, 8
      %s457 = scalar_lea.vmem %s1, %s456
      %s458 = sadd.s32 %s23, 1
      %s459 = smul.u32 %s458, 2
      %s460 = smul.u32 2, %s23
      %s461 = ssub.s32 3, %s460
      %p462 = scmp.lt.s32.totalorder %s461, 2
      %s463 = scalar_select %p462, %s461, 2
      %s464 = smul.u32 8, %s463
      %p465 = scmp.lt.s32.totalorder %s22, 7
      %s466 = scalar_select %p465, %s22, 7
      %p467 = scmp.lt.s32.totalorder %s460, 2
      %s468 = scalar_select %p467, %s460, 2
      %s469 = smul.addr %s466, 3
      %s470 = sadd.s32 %s468, %s469
      %s471 = smul.addr %s470, 8
      %s472 = scalar_lea.vmem %s2, %s471
      %s473 = smul.u32 2, %s23
      %s474 = ssub.s32 3, %s473
      %p475 = scmp.lt.s32.totalorder %s474, 2
      %s476 = scalar_select %p475, %s474, 2
      %s477 = smul.u32 8, %s476
      %s478 = sadd.s32 %s23, 1
      %s479 = smul.u32 %s478, 2
      %p480 = scmp.lt.s32.totalorder %s22, 7
      %s481 = scalar_select %p480, %s22, 7
      %p482 = scmp.lt.s32.totalorder %s479, 2
      %s483 = scalar_select %p482, %s479, 2
      %s484 = smul.addr %s481, 3
      %s485 = sadd.s32 %s483, %s484
      %s486 = smul.addr %s485, 8
      %s487 = scalar_lea.vmem %s3, %s486
      %s488 = sadd.s32 %s23, 1
      %s489 = smul.u32 %s488, 2
      %s490 = smul.u32 2, %s23
      %p491 = scmp.lt.s32.totalorder %s490, 1
      %s492 = scalar_select %p491, %s490, 1
      %s493 = smul.addr %s492, 8
      %s494 = scalar_lea.vmem %s6, %s493
      %s495 = smul.u32 2, %s23
      %s496 = smul.u32 2, %s23
      %p497 = scmp.lt.s32.totalorder %s22, 7
      %s498 = scalar_select %p497, %s22, 7
      %p499 = scmp.lt.s32.totalorder %s496, 1
      %s500 = scalar_select %p499, %s496, 1
      %s501 = smul.addr %s498, 2
      %s502 = sadd.s32 %s500, %s501
      %s503 = smul.addr %s502, 8
      %s504 = scalar_lea.vmem %s7, %s503
      %s505 = smul.u32 2, %s23
      %v506 = vld [vmem:[%s442] sm:$0xff]
      %v507 = vld [vmem:[%s442 + $0x8] sm:$0xff]
      %v508 = vld [vmem:[%s457] sm:$0xff]
      %v509 = vld [vmem:[%s472] sm:$0xff]
      %v510 = vld [vmem:[%s472 + $0x8] sm:$0xff]
      %v511 = vld [vmem:[%s487] sm:$0xff]
      %v512 = vld [vmem:[%s4] sm:$0xff]
      %v513 = vld [vmem:[%s4 + $0x8] sm:$0xff]
      %v514 = vld [vmem:[%s4 + $0x10] sm:$0x1]
      %v515 = vld [vmem:[%s5] sm:$0xff]
      %v516 = vld [vmem:[%s5 + $0x8] sm:$0xff]
      %v517 = vld [vmem:[%s5 + $0x10] sm:$0x1]
      %vm518 = vcmask 138240
      %v520 = vsel %vm518, %v509, 0
      %v523 = vsel %vm518, %v510, 0
      %v526 = vsel %vm518, %v511, 0
      %vm528 = vcmask 1040384
      %v530 = vsel %vm528, %v517, 0
      %532 = vmatpush.msra.mxu0 0.0
      %533 = vmatpush.msra.mxu0 0.0
      %534 = vmatpush.msra.mxu0 0.0
      %535 = vmatpush.msra.mxu0 0.0
      %536 = vmatpush.msra.mxu0 0.0
      %537 = vmatpush.msra.mxu0 0.0
      %538 = vmatpush.msra.mxu0 0.0
      %539 = vmatpush.msra.mxu0 0.0
      %540 = vmatpush.msra.mxu0 0.0
      %541 = vmatpush.msra.mxu0 0.0
      %542 = vmatpush.msra.mxu0 0.0
      %543 = vmatpush.msra.mxu0 0.0
      %544 = vmatpush.msra.mxu0 0.0
      %545 = vmatpush.msra.mxu0 %v530
      %546 = vmatpush.msra.mxu0 %v516
      %547 = vmatpush.msra.mxu0 %v515
      %548 = vmatmul.f32.gmra.mxu0 %v520
      %v549 = vpop.f32.mrf.mxu0
      %v550 = vadd.f32 0.0, %v549
      %551 = vmatmul.f32.gmra.mxu0 %v523
      %v552 = vpop.f32.mrf.mxu0
      %v553 = vadd.f32 0.0, %v552
      %554 = vmatmul.f32.gmra.mxu0 %v526
      %v555 = vpop.f32.mrf.mxu0
      %v556 = vadd.f32 0.0, %v555
      %557 = vdwg.mxu0
      %v559 = vsel %vm518, %v506, 0
      %v562 = vsel %vm518, %v507, 0
      %v565 = vsel %vm518, %v508, 0
      %v568 = vsel %vm528, %v514, 0
      %570 = vmatpush.msra.mxu0 0.0
      %571 = vmatpush.msra.mxu0 0.0
      %572 = vmatpush.msra.mxu0 0.0
      %573 = vmatpush.msra.mxu0 0.0
      %574 = vmatpush.msra.mxu0 0.0
      %575 = vmatpush.msra.mxu0 0.0
      %576 = vmatpush.msra.mxu0 0.0
      %577 = vmatpush.msra.mxu0 0.0
      %578 = vmatpush.msra.mxu0 0.0
      %579 = vmatpush.msra.mxu0 0.0
      %580 = vmatpush.msra.mxu0 0.0
      %581 = vmatpush.msra.mxu0 0.0
      %582 = vmatpush.msra.mxu0 0.0
      %583 = vmatpush.msra.mxu0 %v568
      %584 = vmatpush.msra.mxu0 %v513
      %585 = vmatpush.msra.mxu0 %v512
      %586 = vmatmul.f32.gmra.mxu0 %v559
      %v587 = vpop.f32.mrf.mxu0
      %v588 = vadd.f32 %v550, %v587
      %589 = vmatmul.f32.gmra.mxu0 %v562
      %v590 = vpop.f32.mrf.mxu0
      %v591 = vadd.f32 %v553, %v590
      %592 = vmatmul.f32.gmra.mxu0 %v565
      %v593 = vpop.f32.mrf.mxu0
      %v594 = vadd.f32 %v556, %v593
      %595 = vdwg.mxu0
      %vm596 = vcmask 64512
      %597 = vst.msk [vmem:[#allocation2] sm:$0xff] %vm596, %v588
      %598 = vst.msk [vmem:[#allocation2 + $0x8] sm:$0xff] %vm596, %v591
      %599 = vst.msk [vmem:[#allocation2 + $0x10] sm:$0xff] %vm596, %v594
      %v600 = vld [vmem:[#allocation2 + $0x3] sm:$0xff]
      %v601 = vld [vmem:[#allocation2 + $0xb] sm:$0xff]
      %602 = vst.msk [vmem:[%s504] sm:$0xff] %vm596, %v600
      %603 = vst.msk [vmem:[%s504 + $0x8] sm:$0xff] %vm596, %v601
      %s604 = scalar_lea.vmem %s4, 24
      %v605 = vld [vmem:[%s604] sm:$0xff]
      %v606 = vld [vmem:[%s604 + $0x8] sm:$0xff]
      %v607 = vld [vmem:[%s604 + $0x10] sm:$0x1]
      %s608 = scalar_lea.vmem %s5, 24
      %v609 = vld [vmem:[%s608] sm:$0xff]
      %v610 = vld [vmem:[%s608 + $0x8] sm:$0xff]
      %v611 = vld [vmem:[%s608 + $0x10] sm:$0x1]
      %v613 = vsel %vm528, %v611, 0
      %615 = vmatpush.msra.mxu0 0.0
      %616 = vmatpush.msra.mxu0 0.0
      %617 = vmatpush.msra.mxu0 0.0
      %618 = vmatpush.msra.mxu0 0.0
      %619 = vmatpush.msra.mxu0 0.0
      %620 = vmatpush.msra.mxu0 0.0
      %621 = vmatpush.msra.mxu0 0.0
      %622 = vmatpush.msra.mxu0 0.0
      %623 = vmatpush.msra.mxu0 0.0
      %624 = vmatpush.msra.mxu0 0.0
      %625 = vmatpush.msra.mxu0 0.0
      %626 = vmatpush.msra.mxu0 0.0
      %627 = vmatpush.msra.mxu0 0.0
      %628 = vmatpush.msra.mxu0 %v613
      %629 = vmatpush.msra.mxu0 %v610
      %630 = vmatpush.msra.mxu0 %v609
      %631 = vmatmul.f32.gmra.mxu0 %v520
      %v632 = vpop.f32.mrf.mxu0
      %v633 = vadd.f32 0.0, %v632
      %634 = vmatmul.f32.gmra.mxu0 %v523
      %v635 = vpop.f32.mrf.mxu0
      %v636 = vadd.f32 0.0, %v635
      %637 = vmatmul.f32.gmra.mxu0 %v526
      %v638 = vpop.f32.mrf.mxu0
      %v639 = vadd.f32 0.0, %v638
      %640 = vdwg.mxu0
      %v642 = vsel %vm528, %v607, 0
      %644 = vmatpush.msra.mxu0 0.0
      %645 = vmatpush.msra.mxu0 0.0
      %646 = vmatpush.msra.mxu0 0.0
      %647 = vmatpush.msra.mxu0 0.0
      %648 = vmatpush.msra.mxu0 0.0
      %649 = vmatpush.msra.mxu0 0.0
      %650 = vmatpush.msra.mxu0 0.0
      %651 = vmatpush.msra.mxu0 0.0
      %652 = vmatpush.msra.mxu0 0.0
      %653 = vmatpush.msra.mxu0 0.0
      %654 = vmatpush.msra.mxu0 0.0
      %655 = vmatpush.msra.mxu0 0.0
      %656 = vmatpush.msra.mxu0 0.0
      %657 = vmatpush.msra.mxu0 %v642
      %658 = vmatpush.msra.mxu0 %v606
      %659 = vmatpush.msra.mxu0 %v605
      %660 = vmatmul.f32.gmra.mxu0 %v559
      %v661 = vpop.f32.mrf.mxu0
      %v662 = vadd.f32 %v633, %v661
      %663 = vmatmul.f32.gmra.mxu0 %v562
      %v664 = vpop.f32.mrf.mxu0
      %v665 = vadd.f32 %v636, %v664
      %666 = vmatmul.f32.gmra.mxu0 %v565
      %v667 = vpop.f32.mrf.mxu0
      %v668 = vadd.f32 %v639, %v667
      %669 = vdwg.mxu0
      %670 = vst.msk [vmem:[#allocation2] sm:$0xff] %vm596, %v662
      %671 = vst.msk [vmem:[#allocation2 + $0x8] sm:$0xff] %vm596, %v665
      %672 = vst.msk [vmem:[#allocation2 + $0x10] sm:$0xff] %vm596, %v668
      %v673 = vld [vmem:[#allocation2 + $0x2] sm:$0xff]
      %v674 = vld [vmem:[#allocation2 + $0xa] sm:$0xff]
      %v675 = vld [vmem:[%s504] sm:$0xff]
      %v676 = vld [vmem:[%s504 + $0x8] sm:$0xff]
      %v677 = vadd.f32 %v675, %v673
      %v678 = vadd.f32 %v676, %v674
      %679 = vst.msk [vmem:[%s504] sm:$0xff] %vm596, %v677
      %680 = vst.msk [vmem:[%s504 + $0x8] sm:$0xff] %vm596, %v678
      %s681 = scalar_lea.vmem %s4, 48
      %v682 = vld [vmem:[%s681] sm:$0xff]
      %v683 = vld [vmem:[%s681 + $0x8] sm:$0xff]
      %v684 = vld [vmem:[%s681 + $0x10] sm:$0x1]
      %s685 = scalar_lea.vmem %s5, 48
      %v686 = vld [vmem:[%s685] sm:$0xff]
      %v687 = vld [vmem:[%s685 + $0x8] sm:$0xff]
      %v688 = vld [vmem:[%s685 + $0x10] sm:$0x1]
      %v690 = vsel %vm528, %v688, 0
      %692 = vmatpush.msra.mxu0 0.0
      %693 = vmatpush.msra.mxu0 0.0
      %694 = vmatpush.msra.mxu0 0.0
      %695 = vmatpush.msra.mxu0 0.0
      %696 = vmatpush.msra.mxu0 0.0
      %697 = vmatpush.msra.mxu0 0.0
      %698 = vmatpush.msra.mxu0 0.0
      %699 = vmatpush.msra.mxu0 0.0
      %700 = vmatpush.msra.mxu0 0.0
      %701 = vmatpush.msra.mxu0 0.0
      %702 = vmatpush.msra.mxu0 0.0
      %703 = vmatpush.msra.mxu0 0.0
      %704 = vmatpush.msra.mxu0 0.0
      %705 = vmatpush.msra.mxu0 %v690
      %706 = vmatpush.msra.mxu0 %v687
      %707 = vmatpush.msra.mxu0 %v686
      %708 = vmatmul.f32.gmra.mxu0 %v520
      %v709 = vpop.f32.mrf.mxu0
      %v710 = vadd.f32 0.0, %v709
      %711 = vmatmul.f32.gmra.mxu0 %v523
      %v712 = vpop.f32.mrf.mxu0
      %v713 = vadd.f32 0.0, %v712
      %714 = vmatmul.f32.gmra.mxu0 %v526
      %v715 = vpop.f32.mrf.mxu0
      %v716 = vadd.f32 0.0, %v715
      %717 = vdwg.mxu0
      %v719 = vsel %vm528, %v684, 0
      %721 = vmatpush.msra.mxu0 0.0
      %722 = vmatpush.msra.mxu0 0.0
      %723 = vmatpush.msra.mxu0 0.0
      %724 = vmatpush.msra.mxu0 0.0
      %725 = vmatpush.msra.mxu0 0.0
      %726 = vmatpush.msra.mxu0 0.0
      %727 = vmatpush.msra.mxu0 0.0
      %728 = vmatpush.msra.mxu0 0.0
      %729 = vmatpush.msra.mxu0 0.0
      %730 = vmatpush.msra.mxu0 0.0
      %731 = vmatpush.msra.mxu0 0.0
      %732 = vmatpush.msra.mxu0 0.0
      %733 = vmatpush.msra.mxu0 0.0
      %734 = vmatpush.msra.mxu0 %v719
      %735 = vmatpush.msra.mxu0 %v683
      %736 = vmatpush.msra.mxu0 %v682
      %737 = vmatmul.f32.gmra.mxu0 %v559
      %v738 = vpop.f32.mrf.mxu0
      %v739 = vadd.f32 %v710, %v738
      %740 = vmatmul.f32.gmra.mxu0 %v562
      %v741 = vpop.f32.mrf.mxu0
      %v742 = vadd.f32 %v713, %v741
      %743 = vmatmul.f32.gmra.mxu0 %v565
      %v744 = vpop.f32.mrf.mxu0
      %v745 = vadd.f32 %v716, %v744
      %746 = vdwg.mxu0
      %747 = vst.msk [vmem:[#allocation2] sm:$0xff] %vm596, %v739
      %748 = vst.msk [vmem:[#allocation2 + $0x8] sm:$0xff] %vm596, %v742
      %749 = vst.msk [vmem:[#allocation2 + $0x10] sm:$0xff] %vm596, %v745
      %v750 = vld [vmem:[#allocation2 + $0x1] sm:$0xff]
      %v751 = vld [vmem:[#allocation2 + $0x9] sm:$0xff]
      %v752 = vld [vmem:[%s504] sm:$0xff]
      %v753 = vld [vmem:[%s504 + $0x8] sm:$0xff]
      %v754 = vadd.f32 %v752, %v750
      %v755 = vadd.f32 %v753, %v751
      %756 = vst.msk [vmem:[%s504] sm:$0xff] %vm596, %v754
      %757 = vst.msk [vmem:[%s504 + $0x8] sm:$0xff] %vm596, %v755
      %s758 = scalar_lea.vmem %s4, 72
      %v759 = vld [vmem:[%s758] sm:$0xff]
      %v760 = vld [vmem:[%s758 + $0x8] sm:$0xff]
      %v761 = vld [vmem:[%s758 + $0x10] sm:$0x1]
      %s762 = scalar_lea.vmem %s5, 72
      %v763 = vld [vmem:[%s762] sm:$0xff]
      %v764 = vld [vmem:[%s762 + $0x8] sm:$0xff]
      %v765 = vld [vmem:[%s762 + $0x10] sm:$0x1]
      %v767 = vsel %vm528, %v765, 0
      %769 = vmatpush.msra.mxu0 0.0
      %770 = vmatpush.msra.mxu0 0.0
      %771 = vmatpush.msra.mxu0 0.0
      %772 = vmatpush.msra.mxu0 0.0
      %773 = vmatpush.msra.mxu0 0.0
      %774 = vmatpush.msra.mxu0 0.0
      %775 = vmatpush.msra.mxu0 0.0
      %776 = vmatpush.msra.mxu0 0.0
      %777 = vmatpush.msra.mxu0 0.0
      %778 = vmatpush.msra.mxu0 0.0
      %779 = vmatpush.msra.mxu0 0.0
      %780 = vmatpush.msra.mxu0 0.0
      %781 = vmatpush.msra.mxu0 0.0
      %782 = vmatpush.msra.mxu0 %v767
      %783 = vmatpush.msra.mxu0 %v764
      %784 = vmatpush.msra.mxu0 %v763
      %785 = vmatmul.f32.gmra.mxu0 %v520
      %v786 = vpop.f32.mrf.mxu0
      %v787 = vadd.f32 0.0, %v786
      %788 = vmatmul.f32.gmra.mxu0 %v523
      %v789 = vpop.f32.mrf.mxu0
      %v790 = vadd.f32 0.0, %v789
      %791 = vmatmul.f32.gmra.mxu0 %v526
      %v792 = vpop.f32.mrf.mxu0
      %v793 = vadd.f32 0.0, %v792
      %794 = vdwg.mxu0
      %v796 = vsel %vm528, %v761, 0
      %798 = vmatpush.msra.mxu0 0.0
      %799 = vmatpush.msra.mxu0 0.0
      %800 = vmatpush.msra.mxu0 0.0
      %801 = vmatpush.msra.mxu0 0.0
      %802 = vmatpush.msra.mxu0 0.0
      %803 = vmatpush.msra.mxu0 0.0
      %804 = vmatpush.msra.mxu0 0.0
      %805 = vmatpush.msra.mxu0 0.0
      %806 = vmatpush.msra.mxu0 0.0
      %807 = vmatpush.msra.mxu0 0.0
      %808 = vmatpush.msra.mxu0 0.0
      %809 = vmatpush.msra.mxu0 0.0
      %810 = vmatpush.msra.mxu0 0.0
      %811 = vmatpush.msra.mxu0 %v796
      %812 = vmatpush.msra.mxu0 %v760
      %813 = vmatpush.msra.mxu0 %v759
      %814 = vmatmul.f32.gmra.mxu0 %v559
      %v815 = vpop.f32.mrf.mxu0
      %v816 = vadd.f32 %v787, %v815
      %817 = vmatmul.f32.gmra.mxu0 %v562
      %v818 = vpop.f32.mrf.mxu0
      %v819 = vadd.f32 %v790, %v818
      %820 = vmatmul.f32.gmra.mxu0 %v565
      %v821 = vpop.f32.mrf.mxu0
      %v822 = vadd.f32 %v793, %v821
      %823 = vdwg.mxu0
      %824 = vst.msk [vmem:[#allocation2] sm:$0xff] %vm596, %v816
      %825 = vst.msk [vmem:[#allocation2 + $0x8] sm:$0xff] %vm596, %v819
      %826 = vst.msk [vmem:[#allocation2 + $0x10] sm:$0xff] %vm596, %v822
      %v827 = vld [vmem:[#allocation2] sm:$0xff]
      %v828 = vld [vmem:[#allocation2 + $0x8] sm:$0xff]
      %v829 = vld [vmem:[%s504] sm:$0xff]
      %v830 = vld [vmem:[%s504 + $0x8] sm:$0xff]
      %v831 = vadd.f32 %v829, %v827
      %v832 = vadd.f32 %v830, %v828
      %833 = vst.msk [vmem:[%s504] sm:$0xff] %vm596, %v831
      %834 = vst.msk [vmem:[%s504 + $0x8] sm:$0xff] %vm596, %v832
      %v835 = vld [vmem:[%s504] sm:$0xff]
      %v836 = vld [vmem:[%s504 + $0x8] sm:$0xff]
      %v837 = vld [vmem:[%s494] sm:$0xff]
      %v838 = vld [vmem:[%s494 + $0x8] sm:$0xff]
      %v839 = vmul.f32 %v835, %v837
      %v840 = vmul.f32 %v836, %v838
      %841 = vst.msk [vmem:[%s504] sm:$0xff] %vm596, %v839
      %842 = vst.msk [vmem:[%s504 + $0x8] sm:$0xff] %vm596, %v840
      %s843 = smul.u32 2, %s23
      %p844 = scmp.lt.s32.totalorder %s22, 7
      %s845 = scalar_select %p844, %s22, 7
      %p846 = scmp.lt.s32.totalorder %s843, 1
      %s847 = scalar_select %p846, %s843, 1
      %s848 = smul.addr %s845, 2
      %s849 = sadd.s32 %s847, %s848
      %s850 = smul.addr %s849, 8
      %s851 = scalar_lea.vmem %s7, %s850
      // Predicated region
      $region49: #{_istft_call.1} parent=47 // pred_check
        %p852 = pneg %p238
      $region50: #{_istft_call.1} parent=47 // pred_check_branch
        %854 = sbr.rel (%p852) target = $region52
      $region51: #{_istft_call.1} parent=47 // pred_region
        %s855 = smul.u32 2, %s23
      $region52: #{_istft_call.1} parent=47 // pred_fallthru
        _
    $region48: #{_istft_call.1} parent=5 // pred_fallthru
      _
    %p856 = scmp.le.s32.totalorder 2, %s13
    // Predicated region
    $region53: #{_istft_call.1} parent=5 // pred_check
      %p857 = pneg %p856
    $region54: #{_istft_call.1} parent=5 // pred_check_branch
      %859 = sbr.rel (%p857) target = $region56
    $region55: #{_istft_call.1} parent=5 // pred_region
      %s860 = ssub.s32 %s13, 2
      // Predicated region
      $region57: #{_istft_call.1} parent=55 // pred_check
        %p861 = pneg %p244
      $region58: #{_istft_call.1} parent=55 // pred_check_branch
        %863 = sbr.rel (%p861) target = $region60
      $region59: #{_istft_call.1} parent=55 // pred_region
        %s864 = smul.u32 2, %s25
        %p865 = scmp.lt.s32.totalorder %s24, 7
        %s866 = scalar_select %p865, %s24, 7
        %p867 = scmp.lt.s32.totalorder %s864, 1
        %s868 = scalar_select %p867, %s864, 1
        %s869 = smul.addr %s866, 2
        %s870 = sadd.s32 %s868, %s869
        %s871 = smul.addr %s870, 8
        %s872 = scalar_lea.vmem %s7, %s871
      $region60: #{_istft_call.1} parent=55 // pred_fallthru
        _
    $region56: #{_istft_call.1} parent=5 // pred_fallthru
      _
  $region6: #{_istft_call.1} parent=0 // loop_footer
    %s17 = sadd.s32 1, %s13
  $region7: #{_istft_call.1} parent=0 // loop_footer_branch
    %12 = sbr.rel target = $region3
  $region8: #{_istft_call.1} parent=0 // loop_exit
    _

</llo_original>
